<compile_context>
chip_gen: v6e
topology: v6e:2x2x1
jax: 0.10.0
libtpu: 0.0.40
codegen_flags: <defaults>
</compile_context>

<pallas_src>
import functools

import jax
import jax.numpy as jnp
from jax.experimental import pallas as pl
from jax.experimental.pallas import tpu as pltpu


def _attention_kernel(x_ref, g1_ref, b1_ref, g2_ref, b2_ref,
                      wq_ref, wkv_ref, wo_ref, o_ref,
                      *, num_heads, head_features, q_tile, eps):
    n = x_ref.shape[1]
    m = num_heads * head_features
    scale = head_features ** (-0.5)

    x = x_ref[0].astype(jnp.float32)              # (N, F) full sequence (K/V need all rows)

    def zscore(t):                                # shared LayerNorm core: (t - mu) / std
        mu = jnp.mean(t, axis=-1, keepdims=True)
        var = jnp.mean((t - mu) ** 2, axis=-1, keepdims=True)
        return (t - mu) * jax.lax.rsqrt(var + eps)

    if q_tile == n:
        # Single query tile: query rows == context rows, so ONE mean/var
        # reduction feeds both LayerNorm affines.
        zhat = zscore(x)
        cn = zhat * g2_ref[0] + b2_ref[0]         # context branch -> K, V
        xn_q = zhat * g1_ref[0] + b1_ref[0]       # query branch
        x_q = x                                   # residual rows
    else:
        row0 = pl.multiple_of(pl.program_id(1) * q_tile, q_tile)
        x_q = x_ref[0, pl.ds(row0, q_tile), :].astype(jnp.float32)     # (Tq, F)
        cn = zscore(x) * g2_ref[0] + b2_ref[0]                          # all rows
        xn_q = zscore(x_q) * g1_ref[0] + b1_ref[0]                      # tile rows only

    # Projections: bf16 MXU operands, f32 accumulation; softmax scale folded
    # into q once ((Tq, M) multiply instead of H x (Tq, N)).
    q = jnp.dot(xn_q.astype(jnp.bfloat16), wq_ref[...],
                preferred_element_type=jnp.float32) * scale             # (Tq, M)
    kv = jnp.dot(cn.astype(jnp.bfloat16), wkv_ref[...],
                 preferred_element_type=jnp.float32)                    # (N, 2M)
    k = kv[:, :m].astype(jnp.bfloat16)
    v = kv[:, m:].astype(jnp.bfloat16)

    # Per-head attention.  Softmax math in f32; MXU operands in bf16.
    contract_last = (((1,), (1,)), ((), ()))      # q k^T with no XLU transpose
    head_outs = []
    for h in range(num_heads):                    # static unroll over heads
        lo, hi = h * head_features, (h + 1) * head_features
        qh = q[:, lo:hi].astype(jnp.bfloat16)     # (Tq, D)
        kh = k[:, lo:hi]                          # (N, D)
        vh = v[:, lo:hi]                          # (N, D)
        sim = jax.lax.dot_general(qh, kh, contract_last,
                                  preferred_element_type=jnp.float32)   # (Tq, N)
        sim = sim - jnp.max(sim, axis=-1, keepdims=True)
        p = jnp.exp(sim)
        inv_denom = pl.reciprocal(jnp.sum(p, axis=-1, keepdims=True), approx=True)
        attn = (p * inv_denom).astype(jnp.bfloat16)
        head_outs.append(
            jnp.dot(attn, vh, preferred_element_type=jnp.float32))      # (Tq, D)

    # One fused (Tq, M) @ (M, F) output projection instead of H small K=D dots.
    o_cat = jnp.concatenate(head_outs, axis=-1).astype(jnp.bfloat16)    # (Tq, M)
    res = jnp.dot(o_cat, wo_ref[...], preferred_element_type=jnp.float32)  # (Tq, F)

    o_ref[0] = (x_q + res).astype(o_ref.dtype)    # residual (skip) add
    # TODO(synk): pad F / head_features to 128-lane multiples (dense stores,
    # better MXU column occupancy) when real model dims are not 128-aligned.


def attention_pallas(x, params, *, num_heads, head_features):
    B, N, F = x.shape
    M = num_heads * head_features
    g1, b1, g2, b2, wq, wkv, wo = params

    # bf16 weights: half the VMEM footprint / DMA traffic; accumulation is f32.
    wq = wq.astype(jnp.bfloat16)
    wkv = wkv.astype(jnp.bfloat16)
    wo = wo.astype(jnp.bfloat16)

    # Query-tile size: 128 rows when the sequence divides evenly (bounds the
    # per-head score matrix to 128 x N), otherwise the whole (small) sequence.
    TQ = 128 if N % 128 == 0 else N
    n_q_tiles = N // TQ

    kernel = functools.partial(
        _attention_kernel,
        num_heads=num_heads, head_features=head_features,
        q_tile=TQ, eps=1e-5)

    return pl.pallas_call(
        kernel,
        out_shape=jax.ShapeDtypeStruct((B, N, F), x.dtype),
        grid_spec=pltpu.PrefetchScalarGridSpec(
            num_scalar_prefetch=0,
            grid=(B, n_q_tiles),
            in_specs=[
                pl.BlockSpec((1, N, F), lambda b, q: (b, 0, 0)),   # x (full seq)
                pl.BlockSpec((1, F), lambda b, q: (0, 0)),         # norm gamma
                pl.BlockSpec((1, F), lambda b, q: (0, 0)),         # norm beta
                pl.BlockSpec((1, F), lambda b, q: (0, 0)),         # norm_context gamma
                pl.BlockSpec((1, F), lambda b, q: (0, 0)),         # norm_context beta
                pl.BlockSpec((F, M), lambda b, q: (0, 0)),         # Wq   (in, out)
                pl.BlockSpec((F, 2 * M), lambda b, q: (0, 0)),     # Wkv  (in, 2*out)
                pl.BlockSpec((M, F), lambda b, q: (0, 0)),         # Wo   (in, out)
            ],
            out_specs=pl.BlockSpec((1, TQ, F), lambda b, q: (b, q, 0)),
        ),
        compiler_params=pltpu.CompilerParams(
            dimension_semantics=("parallel", "parallel")),
    )(x, g1, b1, g2, b2, wq, wkv, wo)


def attention_reference(x, params, *, num_heads, head_features):
    """Pure-JAX (f32) reference mirroring the PyTorch forward, for sanity check."""
    g1, b1, g2, b2, wq, wkv, wo = params
    M = num_heads * head_features
    scale = head_features ** (-0.5)

    def ln(t, g, b):
        mu = jnp.mean(t, -1, keepdims=True)
        var = jnp.mean((t - mu) ** 2, -1, keepdims=True)
        return (t - mu) / jnp.sqrt(var + 1e-5) * g[0] + b[0]

    skip = x
    xn = ln(x, g1, b1)
    cn = ln(x, g2, b2)
    q = xn @ wq
    kv = cn @ wkv
    k, v = kv[..., :M], kv[..., M:]
    B, N, _ = x.shape
    rs = lambda t: t.reshape(B, N, num_heads, head_features).transpose(0, 2, 1, 3)
    qh, kh, vh = rs(q), rs(k), rs(v)
    sim = jnp.einsum('bhnd,bhmd->bhnm', qh, kh) * scale
    attn = jax.nn.softmax(sim, axis=-1)
    out = jnp.einsum('bhnm,bhmd->bhnd', attn, vh)
    out = out.transpose(0, 2, 1, 3).reshape(B, N, M)
    return skip + out @ wo


def make_params(key, features, num_heads, head_features):
    M = num_heads * head_features
    k1, k2, k3 = jax.random.split(key, 3)
    # Deterministic init mimicking torch Linear default scale (uniform +-1/sqrt(in)).
    wq = jax.random.uniform(k1, (features, M), jnp.float32,
                            -1.0, 1.0) / jnp.sqrt(features)
    wkv = jax.random.uniform(k2, (features, 2 * M), jnp.float32,
                             -1.0, 1.0) / jnp.sqrt(features)
    wo = jax.random.uniform(k3, (M, features), jnp.float32,
                            -1.0, 1.0) / jnp.sqrt(M)
    g1 = jnp.ones((1, features), jnp.float32)
    b1 = jnp.zeros((1, features), jnp.float32)
    g2 = jnp.ones((1, features), jnp.float32)
    b2 = jnp.zeros((1, features), jnp.float32)
    return (g1, b1, g2, b2, wq, wkv, wo)


if __name__ == "__main__":
    B, N = 2, 8
    features, head_features, num_heads = 32, 8, 4

    key = jax.random.PRNGKey(0)
    kx, kp = jax.random.split(key)
    x = jax.random.normal(kx, (B, N, features), jnp.float32)
    params = make_params(kp, features, num_heads, head_features)

    out = attention_pallas(x, params,
                           num_heads=num_heads, head_features=head_features)
    out = jax.block_until_ready(out)

    ref = attention_reference(x, params,
                              num_heads=num_heads, head_features=head_features)
    assert out.shape == (B, N, features)
    # bf16 MXU operands + approx reciprocal -> compare against f32 reference
    # with a bf16-appropriate tolerance.
    assert jnp.allclose(out, ref, atol=3e-2, rtol=3e-2), "mismatch vs reference"

    print("KERNEL_OK")
</pallas_src>

<mosaic_0001>
module attributes {stable_mosaic.version = 11 : i64} {
  func.func @_attention_kernel(%arg0: i32, %arg1: i32, %arg2: memref<1x8x32xf32, #tpu.memory_space<vmem>>, %arg3: memref<1x32xf32, #tpu.memory_space<vmem>>, %arg4: memref<1x32xf32, #tpu.memory_space<vmem>>, %arg5: memref<1x32xf32, #tpu.memory_space<vmem>>, %arg6: memref<1x32xf32, #tpu.memory_space<vmem>>, %arg7: memref<32x32xbf16, #tpu.memory_space<vmem>>, %arg8: memref<32x64xbf16, #tpu.memory_space<vmem>>, %arg9: memref<32x32xbf16, #tpu.memory_space<vmem>>, %arg10: memref<1x8x32xf32, #tpu.memory_space<vmem>>) attributes {dimension_semantics = [#tpu.dimension_semantics<parallel>, #tpu.dimension_semantics<parallel>], iteration_bounds = array<i64: 2, 1>, scalar_prefetch = 0 : i64, scratch_operands = 0 : i64, tpu.core_type = #tpu.core_type<tc>, window_params = [{transform_indices = @transform_0, window_bounds = array<i64: 1, 8, 32>}, {pipeline_mode = #tpu.pipeline_mode<synchronous>, transform_indices = @transform_1, window_bounds = array<i64: 1, 32>}, {pipeline_mode = #tpu.pipeline_mode<synchronous>, transform_indices = @transform_2, window_bounds = array<i64: 1, 32>}, {pipeline_mode = #tpu.pipeline_mode<synchronous>, transform_indices = @transform_3, window_bounds = array<i64: 1, 32>}, {pipeline_mode = #tpu.pipeline_mode<synchronous>, transform_indices = @transform_4, window_bounds = array<i64: 1, 32>}, {pipeline_mode = #tpu.pipeline_mode<synchronous>, transform_indices = @transform_5, window_bounds = array<i64: 32, 32>}, {pipeline_mode = #tpu.pipeline_mode<synchronous>, transform_indices = @transform_6, window_bounds = array<i64: 32, 64>}, {pipeline_mode = #tpu.pipeline_mode<synchronous>, transform_indices = @transform_7, window_bounds = array<i64: 32, 32>}, {transform_indices = @transform_8, window_bounds = array<i64: 1, 8, 32>}]} {
    %c0 = arith.constant 0 : index
    %c0_0 = arith.constant 0 : index
    %c0_1 = arith.constant 0 : index
    %0 = vector.load %arg2[%c0, %c0_0, %c0_1] : memref<1x8x32xf32, #tpu.memory_space<vmem>>, vector<1x8x32xf32>
    %1 = vector.shape_cast %0 : vector<1x8x32xf32> to vector<8x32xf32>
    %cst = arith.constant dense<0.000000e+00> : vector<8xf32>
    %2 = vector.multi_reduction <add>, %1, %cst [1] : vector<8x32xf32> to vector<8xf32>
    %3 = vector.shape_cast %2 : vector<8xf32> to vector<8x1xf32>
    %cst_2 = arith.constant 3.200000e+01 : f32
    %4 = vector.broadcast %cst_2 : f32 to vector<8x1xf32>
    %5 = arith.divf %3, %4 : vector<8x1xf32>
    %6 = vector.broadcast %5 : vector<8x1xf32> to vector<8x32xf32>
    %7 = arith.subf %1, %6 : vector<8x32xf32>
    %8 = arith.mulf %7, %7 : vector<8x32xf32>
    %cst_3 = arith.constant dense<0.000000e+00> : vector<8xf32>
    %9 = vector.multi_reduction <add>, %8, %cst_3 [1] : vector<8x32xf32> to vector<8xf32>
    %10 = vector.shape_cast %9 : vector<8xf32> to vector<8x1xf32>
    %cst_4 = arith.constant 3.200000e+01 : f32
    %11 = vector.broadcast %cst_4 : f32 to vector<8x1xf32>
    %12 = arith.divf %10, %11 : vector<8x1xf32>
    %13 = vector.broadcast %5 : vector<8x1xf32> to vector<8x32xf32>
    %14 = arith.subf %1, %13 : vector<8x32xf32>
    %cst_5 = arith.constant 9.99999974E-6 : f32
    %15 = vector.broadcast %cst_5 : f32 to vector<8x1xf32>
    %16 = arith.addf %12, %15 : vector<8x1xf32>
    %17 = math.rsqrt %16 : vector<8x1xf32>
    %18 = vector.broadcast %17 : vector<8x1xf32> to vector<8x32xf32>
    %19 = arith.mulf %14, %18 : vector<8x32xf32>
    %c0_6 = arith.constant 0 : index
    %c0_7 = arith.constant 0 : index
    %20 = vector.load %arg5[%c0_6, %c0_7] : memref<1x32xf32, #tpu.memory_space<vmem>>, vector<1x32xf32>
    %21 = vector.shape_cast %20 : vector<1x32xf32> to vector<32xf32>
    %22 = vector.shape_cast %21 : vector<32xf32> to vector<1x32xf32>
    %23 = vector.broadcast %22 : vector<1x32xf32> to vector<8x32xf32>
    %24 = arith.mulf %19, %23 : vector<8x32xf32>
    %c0_8 = arith.constant 0 : index
    %c0_9 = arith.constant 0 : index
    %25 = vector.load %arg6[%c0_8, %c0_9] : memref<1x32xf32, #tpu.memory_space<vmem>>, vector<1x32xf32>
    %26 = vector.shape_cast %25 : vector<1x32xf32> to vector<32xf32>
    %27 = vector.shape_cast %26 : vector<32xf32> to vector<1x32xf32>
    %28 = vector.broadcast %27 : vector<1x32xf32> to vector<8x32xf32>
    %29 = arith.addf %24, %28 : vector<8x32xf32>
    %c0_10 = arith.constant 0 : index
    %c0_11 = arith.constant 0 : index
    %30 = vector.load %arg3[%c0_10, %c0_11] : memref<1x32xf32, #tpu.memory_space<vmem>>, vector<1x32xf32>
    %31 = vector.shape_cast %30 : vector<1x32xf32> to vector<32xf32>
    %32 = vector.shape_cast %31 : vector<32xf32> to vector<1x32xf32>
    %33 = vector.broadcast %32 : vector<1x32xf32> to vector<8x32xf32>
    %34 = arith.mulf %19, %33 : vector<8x32xf32>
    %c0_12 = arith.constant 0 : index
    %c0_13 = arith.constant 0 : index
    %35 = vector.load %arg4[%c0_12, %c0_13] : memref<1x32xf32, #tpu.memory_space<vmem>>, vector<1x32xf32>
    %36 = vector.shape_cast %35 : vector<1x32xf32> to vector<32xf32>
    %37 = vector.shape_cast %36 : vector<32xf32> to vector<1x32xf32>
    %38 = vector.broadcast %37 : vector<1x32xf32> to vector<8x32xf32>
    %39 = arith.addf %34, %38 : vector<8x32xf32>
    %40 = arith.truncf %39 : vector<8x32xf32> to vector<8x32xbf16>
    %c0_14 = arith.constant 0 : index
    %c0_15 = arith.constant 0 : index
    %41 = vector.load %arg7[%c0_14, %c0_15] : memref<32x32xbf16, #tpu.memory_space<vmem>>, vector<32x32xbf16>
    %cst_16 = arith.constant dense<0.000000e+00> : vector<8x32xf32>
    %42 = tpu.matmul %40, %41, %cst_16 {dimension_numbers = #tpu.dot_dimension_numbers<[1], [0], [0], [1], [0, 0, 1, 1], [], []>} : vector<8x32xbf16>, vector<32x32xbf16>, vector<8x32xf32> -> vector<8x32xf32>
    %cst_17 = arith.constant 0.353553385 : f32
    %43 = vector.broadcast %cst_17 : f32 to vector<8x32xf32>
    %44 = arith.mulf %42, %43 : vector<8x32xf32>
    %45 = arith.truncf %29 : vector<8x32xf32> to vector<8x32xbf16>
    %c0_18 = arith.constant 0 : index
    %c0_19 = arith.constant 0 : index
    %46 = vector.load %arg8[%c0_18, %c0_19] : memref<32x64xbf16, #tpu.memory_space<vmem>>, vector<32x64xbf16>
    %cst_20 = arith.constant dense<0.000000e+00> : vector<8x64xf32>
    %47 = tpu.matmul %45, %46, %cst_20 {dimension_numbers = #tpu.dot_dimension_numbers<[1], [0], [0], [1], [0, 0, 1, 1], [], []>} : vector<8x32xbf16>, vector<32x64xbf16>, vector<8x64xf32> -> vector<8x64xf32>
    %48 = vector.extract_strided_slice %47 {offsets = [0, 0], sizes = [8, 32], strides = [1, 1]} : vector<8x64xf32> to vector<8x32xf32>
    %49 = arith.truncf %48 : vector<8x32xf32> to vector<8x32xbf16>
    %50 = vector.extract_strided_slice %47 {offsets = [0, 32], sizes = [8, 32], strides = [1, 1]} : vector<8x64xf32> to vector<8x32xf32>
    %51 = arith.truncf %50 : vector<8x32xf32> to vector<8x32xbf16>
    %52 = vector.extract_strided_slice %44 {offsets = [0, 0], sizes = [8, 8], strides = [1, 1]} : vector<8x32xf32> to vector<8x8xf32>
    %53 = arith.truncf %52 : vector<8x8xf32> to vector<8x8xbf16>
    %54 = vector.extract_strided_slice %49 {offsets = [0, 0], sizes = [8, 8], strides = [1, 1]} : vector<8x32xbf16> to vector<8x8xbf16>
    %55 = vector.extract_strided_slice %51 {offsets = [0, 0], sizes = [8, 8], strides = [1, 1]} : vector<8x32xbf16> to vector<8x8xbf16>
    %cst_21 = arith.constant dense<0.000000e+00> : vector<8x8xf32>
    %56 = tpu.matmul %53, %54, %cst_21 {dimension_numbers = #tpu.dot_dimension_numbers<[1], [1], [0], [0], [0, 0, 1, 0], [], []>} : vector<8x8xbf16>, vector<8x8xbf16>, vector<8x8xf32> -> vector<8x8xf32>
    %cst_22 = arith.constant dense<0xFF800000> : vector<8xf32>
    %57 = vector.multi_reduction <maximumf>, %56, %cst_22 [1] : vector<8x8xf32> to vector<8xf32>
    %58 = vector.shape_cast %57 : vector<8xf32> to vector<8x1xf32>
    %59 = vector.broadcast %58 : vector<8x1xf32> to vector<8x8xf32>
    %60 = arith.subf %56, %59 : vector<8x8xf32>
    %61 = math.exp %60 : vector<8x8xf32>
    %cst_23 = arith.constant dense<0.000000e+00> : vector<8xf32>
    %62 = vector.multi_reduction <add>, %61, %cst_23 [1] : vector<8x8xf32> to vector<8xf32>
    %63 = vector.shape_cast %62 : vector<8xf32> to vector<8x1xf32>
    %64 = tpu.reciprocal %63 {approx = true} : vector<8x1xf32> -> vector<8x1xf32>
    %65 = vector.broadcast %64 : vector<8x1xf32> to vector<8x8xf32>
    %66 = arith.mulf %61, %65 : vector<8x8xf32>
    %67 = arith.truncf %66 : vector<8x8xf32> to vector<8x8xbf16>
    %cst_24 = arith.constant dense<0.000000e+00> : vector<8x8xf32>
    %68 = tpu.matmul %67, %55, %cst_24 {dimension_numbers = #tpu.dot_dimension_numbers<[1], [0], [0], [1], [0, 0, 1, 1], [], []>} : vector<8x8xbf16>, vector<8x8xbf16>, vector<8x8xf32> -> vector<8x8xf32>
    %69 = vector.extract_strided_slice %44 {offsets = [0, 8], sizes = [8, 8], strides = [1, 1]} : vector<8x32xf32> to vector<8x8xf32>
    %70 = arith.truncf %69 : vector<8x8xf32> to vector<8x8xbf16>
    %71 = vector.extract_strided_slice %49 {offsets = [0, 8], sizes = [8, 8], strides = [1, 1]} : vector<8x32xbf16> to vector<8x8xbf16>
    %72 = vector.extract_strided_slice %51 {offsets = [0, 8], sizes = [8, 8], strides = [1, 1]} : vector<8x32xbf16> to vector<8x8xbf16>
    %cst_25 = arith.constant dense<0.000000e+00> : vector<8x8xf32>
    %73 = tpu.matmul %70, %71, %cst_25 {dimension_numbers = #tpu.dot_dimension_numbers<[1], [1], [0], [0], [0, 0, 1, 0], [], []>} : vector<8x8xbf16>, vector<8x8xbf16>, vector<8x8xf32> -> vector<8x8xf32>
    %cst_26 = arith.constant dense<0xFF800000> : vector<8xf32>
    %74 = vector.multi_reduction <maximumf>, %73, %cst_26 [1] : vector<8x8xf32> to vector<8xf32>
    %75 = vector.shape_cast %74 : vector<8xf32> to vector<8x1xf32>
    %76 = vector.broadcast %75 : vector<8x1xf32> to vector<8x8xf32>
    %77 = arith.subf %73, %76 : vector<8x8xf32>
    %78 = math.exp %77 : vector<8x8xf32>
    %cst_27 = arith.constant dense<0.000000e+00> : vector<8xf32>
    %79 = vector.multi_reduction <add>, %78, %cst_27 [1] : vector<8x8xf32> to vector<8xf32>
    %80 = vector.shape_cast %79 : vector<8xf32> to vector<8x1xf32>
    %81 = tpu.reciprocal %80 {approx = true} : vector<8x1xf32> -> vector<8x1xf32>
    %82 = vector.broadcast %81 : vector<8x1xf32> to vector<8x8xf32>
    %83 = arith.mulf %78, %82 : vector<8x8xf32>
    %84 = arith.truncf %83 : vector<8x8xf32> to vector<8x8xbf16>
    %cst_28 = arith.constant dense<0.000000e+00> : vector<8x8xf32>
    %85 = tpu.matmul %84, %72, %cst_28 {dimension_numbers = #tpu.dot_dimension_numbers<[1], [0], [0], [1], [0, 0, 1, 1], [], []>} : vector<8x8xbf16>, vector<8x8xbf16>, vector<8x8xf32> -> vector<8x8xf32>
    %86 = vector.extract_strided_slice %44 {offsets = [0, 16], sizes = [8, 8], strides = [1, 1]} : vector<8x32xf32> to vector<8x8xf32>
    %87 = arith.truncf %86 : vector<8x8xf32> to vector<8x8xbf16>
    %88 = vector.extract_strided_slice %49 {offsets = [0, 16], sizes = [8, 8], strides = [1, 1]} : vector<8x32xbf16> to vector<8x8xbf16>
    %89 = vector.extract_strided_slice %51 {offsets = [0, 16], sizes = [8, 8], strides = [1, 1]} : vector<8x32xbf16> to vector<8x8xbf16>
    %cst_29 = arith.constant dense<0.000000e+00> : vector<8x8xf32>
    %90 = tpu.matmul %87, %88, %cst_29 {dimension_numbers = #tpu.dot_dimension_numbers<[1], [1], [0], [0], [0, 0, 1, 0], [], []>} : vector<8x8xbf16>, vector<8x8xbf16>, vector<8x8xf32> -> vector<8x8xf32>
    %cst_30 = arith.constant dense<0xFF800000> : vector<8xf32>
    %91 = vector.multi_reduction <maximumf>, %90, %cst_30 [1] : vector<8x8xf32> to vector<8xf32>
    %92 = vector.shape_cast %91 : vector<8xf32> to vector<8x1xf32>
    %93 = vector.broadcast %92 : vector<8x1xf32> to vector<8x8xf32>
    %94 = arith.subf %90, %93 : vector<8x8xf32>
    %95 = math.exp %94 : vector<8x8xf32>
    %cst_31 = arith.constant dense<0.000000e+00> : vector<8xf32>
    %96 = vector.multi_reduction <add>, %95, %cst_31 [1] : vector<8x8xf32> to vector<8xf32>
    %97 = vector.shape_cast %96 : vector<8xf32> to vector<8x1xf32>
    %98 = tpu.reciprocal %97 {approx = true} : vector<8x1xf32> -> vector<8x1xf32>
    %99 = vector.broadcast %98 : vector<8x1xf32> to vector<8x8xf32>
    %100 = arith.mulf %95, %99 : vector<8x8xf32>
    %101 = arith.truncf %100 : vector<8x8xf32> to vector<8x8xbf16>
    %cst_32 = arith.constant dense<0.000000e+00> : vector<8x8xf32>
    %102 = tpu.matmul %101, %89, %cst_32 {dimension_numbers = #tpu.dot_dimension_numbers<[1], [0], [0], [1], [0, 0, 1, 1], [], []>} : vector<8x8xbf16>, vector<8x8xbf16>, vector<8x8xf32> -> vector<8x8xf32>
    %103 = vector.extract_strided_slice %44 {offsets = [0, 24], sizes = [8, 8], strides = [1, 1]} : vector<8x32xf32> to vector<8x8xf32>
    %104 = arith.truncf %103 : vector<8x8xf32> to vector<8x8xbf16>
    %105 = vector.extract_strided_slice %49 {offsets = [0, 24], sizes = [8, 8], strides = [1, 1]} : vector<8x32xbf16> to vector<8x8xbf16>
    %106 = vector.extract_strided_slice %51 {offsets = [0, 24], sizes = [8, 8], strides = [1, 1]} : vector<8x32xbf16> to vector<8x8xbf16>
    %cst_33 = arith.constant dense<0.000000e+00> : vector<8x8xf32>
    %107 = tpu.matmul %104, %105, %cst_33 {dimension_numbers = #tpu.dot_dimension_numbers<[1], [1], [0], [0], [0, 0, 1, 0], [], []>} : vector<8x8xbf16>, vector<8x8xbf16>, vector<8x8xf32> -> vector<8x8xf32>
    %cst_34 = arith.constant dense<0xFF800000> : vector<8xf32>
    %108 = vector.multi_reduction <maximumf>, %107, %cst_34 [1] : vector<8x8xf32> to vector<8xf32>
    %109 = vector.shape_cast %108 : vector<8xf32> to vector<8x1xf32>
    %110 = vector.broadcast %109 : vector<8x1xf32> to vector<8x8xf32>
    %111 = arith.subf %107, %110 : vector<8x8xf32>
    %112 = math.exp %111 : vector<8x8xf32>
    %cst_35 = arith.constant dense<0.000000e+00> : vector<8xf32>
    %113 = vector.multi_reduction <add>, %112, %cst_35 [1] : vector<8x8xf32> to vector<8xf32>
    %114 = vector.shape_cast %113 : vector<8xf32> to vector<8x1xf32>
    %115 = tpu.reciprocal %114 {approx = true} : vector<8x1xf32> -> vector<8x1xf32>
    %116 = vector.broadcast %115 : vector<8x1xf32> to vector<8x8xf32>
    %117 = arith.mulf %112, %116 : vector<8x8xf32>
    %118 = arith.truncf %117 : vector<8x8xf32> to vector<8x8xbf16>
    %cst_36 = arith.constant dense<0.000000e+00> : vector<8x8xf32>
    %119 = tpu.matmul %118, %106, %cst_36 {dimension_numbers = #tpu.dot_dimension_numbers<[1], [0], [0], [1], [0, 0, 1, 1], [], []>} : vector<8x8xbf16>, vector<8x8xbf16>, vector<8x8xf32> -> vector<8x8xf32>
    %120 = tpu.concatenate %68, %85, %102, %119 in 1 : vector<8x8xf32>, vector<8x8xf32>, vector<8x8xf32>, vector<8x8xf32> -> vector<8x32xf32>
    %121 = arith.truncf %120 : vector<8x32xf32> to vector<8x32xbf16>
    %c0_37 = arith.constant 0 : index
    %c0_38 = arith.constant 0 : index
    %122 = vector.load %arg9[%c0_37, %c0_38] : memref<32x32xbf16, #tpu.memory_space<vmem>>, vector<32x32xbf16>
    %cst_39 = arith.constant dense<0.000000e+00> : vector<8x32xf32>
    %123 = tpu.matmul %121, %122, %cst_39 {dimension_numbers = #tpu.dot_dimension_numbers<[1], [0], [0], [1], [0, 0, 1, 1], [], []>} : vector<8x32xbf16>, vector<32x32xbf16>, vector<8x32xf32> -> vector<8x32xf32>
    %124 = arith.addf %1, %123 : vector<8x32xf32>
    %c0_40 = arith.constant 0 : index
    %c0_41 = arith.constant 0 : index
    %c0_42 = arith.constant 0 : index
    %125 = vector.load %arg10[%c0_40, %c0_41, %c0_42] : memref<1x8x32xf32, #tpu.memory_space<vmem>>, vector<1x8x32xf32>
    %126 = vector.shape_cast %125 : vector<1x8x32xf32> to vector<8x32xf32>
    %127 = vector.shape_cast %124 : vector<8x32xf32> to vector<1x8x32xf32>
    tpu.vector_store %arg10[%c0_40, %c0_41, %c0_42], %127 {strides = array<i32>} : memref<1x8x32xf32, #tpu.memory_space<vmem>>, vector<1x8x32xf32>,
    return
  }
  func.func @transform_0(%arg0: i32, %arg1: i32) -> (i32, i32, i32) {
    %c0_i32 = arith.constant 0 : i32
    %c0_i32_0 = arith.constant 0 : i32
    %c0_i32_1 = arith.constant 0 : i32
    return %arg0, %c0_i32, %c0_i32_0 : i32, i32, i32
  }
  func.func @transform_1(%arg0: i32, %arg1: i32) -> (i32, i32) {
    %c0_i32 = arith.constant 0 : i32
    %c0_i32_0 = arith.constant 0 : i32
    %c0_i32_1 = arith.constant 0 : i32
    return %c0_i32, %c0_i32_0 : i32, i32
  }
  func.func @transform_2(%arg0: i32, %arg1: i32) -> (i32, i32) {
    %c0_i32 = arith.constant 0 : i32
    %c0_i32_0 = arith.constant 0 : i32
    %c0_i32_1 = arith.constant 0 : i32
    return %c0_i32, %c0_i32_0 : i32, i32
  }
  func.func @transform_3(%arg0: i32, %arg1: i32) -> (i32, i32) {
    %c0_i32 = arith.constant 0 : i32
    %c0_i32_0 = arith.constant 0 : i32
    %c0_i32_1 = arith.constant 0 : i32
    return %c0_i32, %c0_i32_0 : i32, i32
  }
  func.func @transform_4(%arg0: i32, %arg1: i32) -> (i32, i32) {
    %c0_i32 = arith.constant 0 : i32
    %c0_i32_0 = arith.constant 0 : i32
    %c0_i32_1 = arith.constant 0 : i32
    return %c0_i32, %c0_i32_0 : i32, i32
  }
  func.func @transform_5(%arg0: i32, %arg1: i32) -> (i32, i32) {
    %c0_i32 = arith.constant 0 : i32
    %c0_i32_0 = arith.constant 0 : i32
    %c0_i32_1 = arith.constant 0 : i32
    return %c0_i32, %c0_i32_0 : i32, i32
  }
  func.func @transform_6(%arg0: i32, %arg1: i32) -> (i32, i32) {
    %c0_i32 = arith.constant 0 : i32
    %c0_i32_0 = arith.constant 0 : i32
    %c0_i32_1 = arith.constant 0 : i32
    return %c0_i32, %c0_i32_0 : i32, i32
  }
  func.func @transform_7(%arg0: i32, %arg1: i32) -> (i32, i32) {
    %c0_i32 = arith.constant 0 : i32
    %c0_i32_0 = arith.constant 0 : i32
    %c0_i32_1 = arith.constant 0 : i32
    return %c0_i32, %c0_i32_0 : i32, i32
  }
  func.func @transform_8(%arg0: i32, %arg1: i32) -> (i32, i32, i32) {
    %c0_i32 = arith.constant 0 : i32
    %c0_i32_0 = arith.constant 0 : i32
    return %arg0, %arg1, %c0_i32 : i32, i32, i32
  }
}

</mosaic_0001>

<llo_original>
// kernel: tpu_custom_call.1
$region0: #{tpu_custom_call.1}
  #allocation0 [shape = 'u32[]', space=smem, size = 0x4, offset = 0x4, fixed_abs, tag = 'smem constant byte address 0x4 - core index']
  #allocation1 [shape = 'u32[144,128]{1,0:T(1,128)}', space=vmem, size = 0x12000, scoped, tag = 'internal scratch']
  %s0 = inlined_call_operand.hbm [shape: f32[2,8,32], index: 0, kind: input, shape index: {}]
  %s1 = inlined_call_operand.vmem [shape: f32[1,32], index: 1, kind: input, shape index: {}]
  %s2 = inlined_call_operand.vmem [shape: f32[1,32], index: 2, kind: input, shape index: {}]
  %s3 = inlined_call_operand.vmem [shape: f32[1,32], index: 3, kind: input, shape index: {}]
  %s4 = inlined_call_operand.vmem [shape: f32[1,32], index: 4, kind: input, shape index: {}]
  %s5 = inlined_call_operand.hbm [shape: bf16[32,32], index: 5, kind: input, shape index: {}]
  %s6 = inlined_call_operand.hbm [shape: bf16[32,64], index: 6, kind: input, shape index: {}]
  %s7 = inlined_call_operand.hbm [shape: bf16[32,32], index: 7, kind: input, shape index: {}]
  %s8 = inlined_call_operand.hbm [shape: f32[2,8,32], index: 8, kind: output, shape index: {}]
  %s9 = sld [smem:[#allocation0]]
  $region81: #{tpu_custom_call.1} parent=0
    _
  %s11 = ssub.s32 1, %s9
  %s12 = scalar_select 0, %s11, %s9
  $region1: #{tpu_custom_call.1} parent=0
    #allocation2 [shape = 'u8[8192]{0}', space=vmem, size = 0x2000, scoped, tag = 'input window, operand 0']
    #allocation3 [shape = 's32[2]{0}', space=sflag, size = 0x8, scoped, tag = 'scoped memory for tpu_custom_call.1']
    #allocation4 [shape = 's32[2]{0}', space=sflag, size = 0x8, scoped, tag = 'scoped memory for tpu_custom_call.1']
    #allocation5 [shape = 'u8[8192]{0}', space=vmem, size = 0x2000, scoped, tag = 'input window, operand 5, single buffered']
    #allocation6 [shape = 's32[1]{0}', space=sflag, size = 0x4, scoped, tag = 'scoped memory for tpu_custom_call.1']
    #allocation7 [shape = 'u8[8192]{0}', space=vmem, size = 0x2000, scoped, tag = 'input window, operand 6, single buffered']
    #allocation8 [shape = 'u8[8192]{0}', space=vmem, size = 0x2000, scoped, tag = 'input window, operand 7, single buffered']
    #allocation9 [shape = 's32[1]{0}', space=sflag, size = 0x4, scoped, tag = 'scoped memory for tpu_custom_call.1']
    #allocation10 [shape = 'u8[8192]{0}', space=vmem, size = 0x2000, scoped, tag = 'output window, operand 0']
    %13 = vsyncpa [#allocation3], 0
    %s14 = scalar_lea.sflag [#allocation3], 1
    %15 = vsyncpa %s14, 0
    %16 = vsyncpa [#allocation6], 0
    %17 = vsyncpa [#allocation9], 0
    %18 = vsyncpa [#allocation4], 0
    %s19 = scalar_lea.sflag [#allocation4], 1
    %20 = vsyncpa %s19, 0
    loop: start=0, step=1, limit=4
    $region2: #{tpu_custom_call.1} parent=1 // loop_pre_header
      _
    $region3: #{tpu_custom_call.1} parent=1 // loop_header
      %s22 = sphi 0, %s26
      %p23 = scmp.ge.s32.totalorder %s22, 4
      %s29 = sphi 0, %s41
      %s30 = sphi 0, %s37
      %s31 = sphi 0, %s29
      %s32 = sphi 0, %s30
      %s33 = sphi 0, %s31
      %s34 = sphi 0, %s32
      %s44 = sphi 0, %s46
      %s47 = sphi 0, %s44
      %s48 = sphi 0, %s47
      %s64 = sphi 0, %s48
      %s68 = sphi 0, %s68
      %s70 = sphi 0, %s68
      %s71 = sphi 0, %s70
      %s85 = sphi 0, %s71
      %s89 = sphi 0, %s89
      %s91 = sphi 0, %s89
      %s92 = sphi 0, %s91
      %s106 = sphi 0, %s92
      %s110 = sphi 0, %s110
      %s112 = sphi 0, %s110
      %s113 = sphi 0, %s112
      %s127 = sphi 0, %s113
      %s131 = sphi 0, %s131
      %s133 = sphi 0, %s131
      %s134 = sphi 0, %s133
      %s148 = sphi 0, %s134
      %s152 = sphi 0, %s152
      %s154 = sphi 0, %s152
      %s155 = sphi 0, %s154
      %s169 = sphi 0, %s155
      %s173 = sphi 0, %s173
      %s175 = sphi 0, %s173
      %s176 = sphi 0, %s175
      %s190 = sphi 0, %s176
      %s194 = sphi 0, %s194
      %s196 = sphi 0, %s194
      %s197 = sphi 0, %s196
      %s211 = sphi 0, %s197
      %s219 = sphi 0, %s221
      %s222 = sphi 0, %s219
      %s223 = sphi 0, %s222
      %s239 = sphi 0, %s223
    $region4: #{tpu_custom_call.1} parent=1 // loop_header_branch
      %25 = sbr.rel (%p23) target = $region8
    $region5: #{tpu_custom_call.1} parent=1 // loop_body
      %s27 = ssub.s32 %s22, 1
      %s28 = ssub.s32 %s22, 2
      %s35 = sadd.s32 1, %s30
      %p36 = scmp.ge.s32.totalorder %s35, 1
      %s37 = scalar_select %p36, 0, %s35
      %s38 = sadd.s32 1, %s29
      %s39 = scalar_select %p36, %s38, %s29
      %p40 = scmp.ge.s32.totalorder %s39, 2
      %s41 = scalar_select %p40, 0, %s39
      %s42 = ssub.s32 %s29, %s41
      %p43 = scmp.eq.s32.totalorder %s42, 0
      %s45 = sadd.s32 %s44, 1
      %s46 = scalar_select %p43, %s44, %s45
      %p49 = pneg %p43
      %p50 = scmp.eq.s32.totalorder %s22, 1
      %p51 = por %p49, %p50
      %p52 = scmp.ne.s32.totalorder %s44, %s47
      %p53 = scmp.eq.s32.totalorder %s22, 0
      %p54 = por %p52, %p53
      %p55 = scmp.ne.s32.totalorder %s44, %s47
      %p56 = scmp.eq.s32.totalorder %s27, 1
      %p57 = por %p55, %p56
      %p58 = scmp.ne.s32.totalorder %s47, %s48
      %p59 = scmp.eq.s32.totalorder %s27, 0
      %p60 = por %p58, %p59
      %p61 = scmp.ne.s32.totalorder %s47, %s48
      %p62 = scmp.eq.s32.totalorder %s28, 1
      %p63 = por %p61, %p62
      %p65 = scmp.ne.s32.totalorder %s48, %s64
      %p66 = scmp.eq.s32.totalorder %s28, 0
      %p67 = por %p65, %p66
      %s69 = sadd.s32 %s68, 1
      %p72 = scmp.eq.s32.totalorder %s22, 1
      %p73 = scmp.ne.s32.totalorder %s68, %s70
      %p74 = scmp.eq.s32.totalorder %s22, 0
      %p75 = por %p73, %p74
      %p76 = scmp.ne.s32.totalorder %s68, %s70
      %p77 = scmp.eq.s32.totalorder %s27, 1
      %p78 = por %p76, %p77
      %p79 = scmp.ne.s32.totalorder %s70, %s71
      %p80 = scmp.eq.s32.totalorder %s27, 0
      %p81 = por %p79, %p80
      %p82 = scmp.ne.s32.totalorder %s70, %s71
      %p83 = scmp.eq.s32.totalorder %s28, 1
      %p84 = por %p82, %p83
      %p86 = scmp.ne.s32.totalorder %s71, %s85
      %p87 = scmp.eq.s32.totalorder %s28, 0
      %p88 = por %p86, %p87
      %s90 = sadd.s32 %s89, 1
      %p93 = scmp.eq.s32.totalorder %s22, 1
      %p94 = scmp.ne.s32.totalorder %s89, %s91
      %p95 = scmp.eq.s32.totalorder %s22, 0
      %p96 = por %p94, %p95
      %p97 = scmp.ne.s32.totalorder %s89, %s91
      %p98 = scmp.eq.s32.totalorder %s27, 1
      %p99 = por %p97, %p98
      %p100 = scmp.ne.s32.totalorder %s91, %s92
      %p101 = scmp.eq.s32.totalorder %s27, 0
      %p102 = por %p100, %p101
      %p103 = scmp.ne.s32.totalorder %s91, %s92
      %p104 = scmp.eq.s32.totalorder %s28, 1
      %p105 = por %p103, %p104
      %p107 = scmp.ne.s32.totalorder %s92, %s106
      %p108 = scmp.eq.s32.totalorder %s28, 0
      %p109 = por %p107, %p108
      %s111 = sadd.s32 %s110, 1
      %p114 = scmp.eq.s32.totalorder %s22, 1
      %p115 = scmp.ne.s32.totalorder %s110, %s112
      %p116 = scmp.eq.s32.totalorder %s22, 0
      %p117 = por %p115, %p116
      %p118 = scmp.ne.s32.totalorder %s110, %s112
      %p119 = scmp.eq.s32.totalorder %s27, 1
      %p120 = por %p118, %p119
      %p121 = scmp.ne.s32.totalorder %s112, %s113
      %p122 = scmp.eq.s32.totalorder %s27, 0
      %p123 = por %p121, %p122
      %p124 = scmp.ne.s32.totalorder %s112, %s113
      %p125 = scmp.eq.s32.totalorder %s28, 1
      %p126 = por %p124, %p125
      %p128 = scmp.ne.s32.totalorder %s113, %s127
      %p129 = scmp.eq.s32.totalorder %s28, 0
      %p130 = por %p128, %p129
      %s132 = sadd.s32 %s131, 1
      %p135 = scmp.eq.s32.totalorder %s22, 1
      %p136 = scmp.ne.s32.totalorder %s131, %s133
      %p137 = scmp.eq.s32.totalorder %s22, 0
      %p138 = por %p136, %p137
      %p139 = scmp.ne.s32.totalorder %s131, %s133
      %p140 = scmp.eq.s32.totalorder %s27, 1
      %p141 = por %p139, %p140
      %p142 = scmp.ne.s32.totalorder %s133, %s134
      %p143 = scmp.eq.s32.totalorder %s27, 0
      %p144 = por %p142, %p143
      %p145 = scmp.ne.s32.totalorder %s133, %s134
      %p146 = scmp.eq.s32.totalorder %s28, 1
      %p147 = por %p145, %p146
      %p149 = scmp.ne.s32.totalorder %s134, %s148
      %p150 = scmp.eq.s32.totalorder %s28, 0
      %p151 = por %p149, %p150
      %s153 = sadd.s32 %s152, 1
      %p156 = scmp.eq.s32.totalorder %s22, 1
      %p157 = scmp.ne.s32.totalorder %s152, %s154
      %p158 = scmp.eq.s32.totalorder %s22, 0
      %p159 = por %p157, %p158
      %p160 = scmp.ne.s32.totalorder %s152, %s154
      %p161 = scmp.eq.s32.totalorder %s27, 1
      %p162 = por %p160, %p161
      %p163 = scmp.ne.s32.totalorder %s154, %s155
      %p164 = scmp.eq.s32.totalorder %s27, 0
      %p165 = por %p163, %p164
      %p166 = scmp.ne.s32.totalorder %s154, %s155
      %p167 = scmp.eq.s32.totalorder %s28, 1
      %p168 = por %p166, %p167
      %p170 = scmp.ne.s32.totalorder %s155, %s169
      %p171 = scmp.eq.s32.totalorder %s28, 0
      %p172 = por %p170, %p171
      %s174 = sadd.s32 %s173, 1
      %p177 = scmp.eq.s32.totalorder %s22, 1
      %p178 = scmp.ne.s32.totalorder %s173, %s175
      %p179 = scmp.eq.s32.totalorder %s22, 0
      %p180 = por %p178, %p179
      %p181 = scmp.ne.s32.totalorder %s173, %s175
      %p182 = scmp.eq.s32.totalorder %s27, 1
      %p183 = por %p181, %p182
      %p184 = scmp.ne.s32.totalorder %s175, %s176
      %p185 = scmp.eq.s32.totalorder %s27, 0
      %p186 = por %p184, %p185
      %p187 = scmp.ne.s32.totalorder %s175, %s176
      %p188 = scmp.eq.s32.totalorder %s28, 1
      %p189 = por %p187, %p188
      %p191 = scmp.ne.s32.totalorder %s176, %s190
      %p192 = scmp.eq.s32.totalorder %s28, 0
      %p193 = por %p191, %p192
      %s195 = sadd.s32 %s194, 1
      %p198 = scmp.eq.s32.totalorder %s22, 1
      %p199 = scmp.ne.s32.totalorder %s194, %s196
      %p200 = scmp.eq.s32.totalorder %s22, 0
      %p201 = por %p199, %p200
      %p202 = scmp.ne.s32.totalorder %s194, %s196
      %p203 = scmp.eq.s32.totalorder %s27, 1
      %p204 = por %p202, %p203
      %p205 = scmp.ne.s32.totalorder %s196, %s197
      %p206 = scmp.eq.s32.totalorder %s27, 0
      %p207 = por %p205, %p206
      %p208 = scmp.ne.s32.totalorder %s196, %s197
      %p209 = scmp.eq.s32.totalorder %s28, 1
      %p210 = por %p208, %p209
      %p212 = scmp.ne.s32.totalorder %s197, %s211
      %p213 = scmp.eq.s32.totalorder %s28, 0
      %p214 = por %p212, %p213
      %s215 = ssub.s32 %s29, %s41
      %s216 = ssub.s32 %s30, %s37
      %s217 = sor.u32 %s215, %s216
      %p218 = scmp.eq.s32.totalorder %s217, 0
      %s220 = sadd.s32 %s219, 1
      %s221 = scalar_select %p218, %s219, %s220
      %p224 = pneg %p218
      %p225 = scmp.eq.s32.totalorder %s22, 1
      %p226 = por %p224, %p225
      %p227 = scmp.ne.s32.totalorder %s219, %s222
      %p228 = scmp.eq.s32.totalorder %s22, 0
      %p229 = por %p227, %p228
      %p230 = scmp.ne.s32.totalorder %s219, %s222
      %p231 = scmp.eq.s32.totalorder %s27, 1
      %p232 = por %p230, %p231
      %p233 = scmp.ne.s32.totalorder %s222, %s223
      %p234 = scmp.eq.s32.totalorder %s27, 0
      %p235 = por %p233, %p234
      %p236 = scmp.ne.s32.totalorder %s222, %s223
      %p237 = scmp.eq.s32.totalorder %s28, 1
      %p238 = por %p236, %p237
      %p240 = scmp.ne.s32.totalorder %s223, %s239
      %p241 = scmp.eq.s32.totalorder %s28, 0
      %p242 = por %p240, %p241
      %p243 = scmp.le.s32.totalorder 1, %s22
      %p244 = scmp.lt.s32.totalorder %s22, 3
      %p245 = pnand %p243, %p244
      %p246 = pneg %p245
      // Predicated region
      $region9: #{tpu_custom_call.1} parent=5 // pred_check
        _
      $region10: #{tpu_custom_call.1} parent=5 // pred_check_branch
        %248 = sbr.rel (%p245) target = $region12
      $region11: #{tpu_custom_call.1} parent=5 // pred_region
        %s249 = ssub.s32 %s22, 1
        // Predicated region
        $region13: #{tpu_custom_call.1} parent=11 // pred_check
          %p250 = pneg %p81
        $region14: #{tpu_custom_call.1} parent=11 // pred_check_branch
          %252 = sbr.rel (%p250) target = $region16
        $region15: #{tpu_custom_call.1} parent=11 // pred_region
          _
        $region16: #{tpu_custom_call.1} parent=11 // pred_fallthru
          _
        // Predicated region
        $region17: #{tpu_custom_call.1} parent=11 // pred_check
          %p253 = pneg %p102
        $region18: #{tpu_custom_call.1} parent=11 // pred_check_branch
          %255 = sbr.rel (%p253) target = $region20
        $region19: #{tpu_custom_call.1} parent=11 // pred_region
          _
        $region20: #{tpu_custom_call.1} parent=11 // pred_fallthru
          _
        // Predicated region
        $region21: #{tpu_custom_call.1} parent=11 // pred_check
          %p256 = pneg %p123
        $region22: #{tpu_custom_call.1} parent=11 // pred_check_branch
          %258 = sbr.rel (%p256) target = $region24
        $region23: #{tpu_custom_call.1} parent=11 // pred_region
          _
        $region24: #{tpu_custom_call.1} parent=11 // pred_fallthru
          _
        // Predicated region
        $region25: #{tpu_custom_call.1} parent=11 // pred_check
          %p259 = pneg %p144
        $region26: #{tpu_custom_call.1} parent=11 // pred_check_branch
          %261 = sbr.rel (%p259) target = $region28
        $region27: #{tpu_custom_call.1} parent=11 // pred_region
          _
        $region28: #{tpu_custom_call.1} parent=11 // pred_fallthru
          _
        // Predicated region
        $region29: #{tpu_custom_call.1} parent=11 // pred_check
          %p262 = pneg %p165
        $region30: #{tpu_custom_call.1} parent=11 // pred_check_branch
          %264 = sbr.rel (%p262) target = $region32
        $region31: #{tpu_custom_call.1} parent=11 // pred_region
          %s266 = ssub.s32 256, 256
          %267 = vsyncadd [#allocation6], %s266
          %s268 = sshll.u32 [#allocation5], 4
          %s269 = int_to_ptr.vmem [resolvable:$true] %s268
          %274 = dma.hbm_to_vmem [thread:$0]  %s5, 256, %s269, [#allocation6], 64, 64, 4
        $region32: #{tpu_custom_call.1} parent=11 // pred_fallthru
          _
        // Predicated region
        $region33: #{tpu_custom_call.1} parent=11 // pred_check
          %p275 = pneg %p186
        $region34: #{tpu_custom_call.1} parent=11 // pred_check_branch
          %277 = sbr.rel (%p275) target = $region36
        $region35: #{tpu_custom_call.1} parent=11 // pred_region
          %s279 = ssub.s32 256, 256
          %280 = vsyncadd [#allocation6], %s279
          %s281 = sshll.u32 [#allocation7], 4
          %s282 = int_to_ptr.vmem [resolvable:$true] %s281
          %287 = dma.hbm_to_vmem [thread:$0]  %s6, 256, %s282, [#allocation6], 64, 64, 4
        $region36: #{tpu_custom_call.1} parent=11 // pred_fallthru
          _
        // Predicated region
        $region37: #{tpu_custom_call.1} parent=11 // pred_check
          %p288 = pneg %p207
        $region38: #{tpu_custom_call.1} parent=11 // pred_check_branch
          %290 = sbr.rel (%p288) target = $region40
        $region39: #{tpu_custom_call.1} parent=11 // pred_region
          %s292 = ssub.s32 256, 256
          %293 = vsyncadd [#allocation9], %s292
          %s294 = sshll.u32 [#allocation8], 4
          %s295 = int_to_ptr.vmem [resolvable:$true] %s294
          %300 = dma.hbm_to_vmem [thread:$0]  %s7, 256, %s295, [#allocation9], 64, 64, 4
        $region40: #{tpu_custom_call.1} parent=11 // pred_fallthru
          _
      $region12: #{tpu_custom_call.1} parent=5 // pred_fallthru
        _
      %p301 = scmp.lt.s32.totalorder %s22, 2
      // Predicated region
      $region41: #{tpu_custom_call.1} parent=5 // pred_check
        %p302 = pneg %p301
      $region42: #{tpu_custom_call.1} parent=5 // pred_check_branch
        %304 = sbr.rel (%p302) target = $region44
      $region43: #{tpu_custom_call.1} parent=5 // pred_region
        // Predicated region
        $region45: #{tpu_custom_call.1} parent=43 // pred_check
          %p305 = pneg %p54
        $region46: #{tpu_custom_call.1} parent=43 // pred_check_branch
          %307 = sbr.rel (%p305) target = $region48
        $region47: #{tpu_custom_call.1} parent=43 // pred_region
          %s308 = sand.u32 %s44, 1
          %s309 = scalar_lea.sflag [#allocation3], %s308
          %s310 = sand.u32 %s44, 1
          %s311 = smul.addr %s310, 8
          %s312 = scalar_lea.vmem [#allocation2], %s311
          %s314 = ssub.s32 128, 128
          %315 = vsyncadd %s309, %s314
          %s316 = smul.addr %s29, 128
          %s317 = scalar_lea.hbm %s0, %s316
          %s319 = sshll.u32 %s312, 4
          %s320 = int_to_ptr.vmem [resolvable:$true] %s319
          %322 = dma.hbm_to_vmem [thread:$0]  %s317, 128, %s320, %s309
        $region48: #{tpu_custom_call.1} parent=43 // pred_fallthru
          _
      $region44: #{tpu_custom_call.1} parent=5 // pred_fallthru
        _
      %p323 = scmp.le.s32.totalorder 1, %s22
      %p324 = scmp.lt.s32.totalorder %s22, 3
      %p325 = pnand %p323, %p324
      %p326 = pneg %p325
      // Predicated region
      $region49: #{tpu_custom_call.1} parent=5 // pred_check
        _
      $region50: #{tpu_custom_call.1} parent=5 // pred_check_branch
        %328 = sbr.rel (%p325) target = $region52
      $region51: #{tpu_custom_call.1} parent=5 // pred_region
        %s329 = ssub.s32 %s22, 1
        %s330 = sand.u32 %s47, 1
        %s331 = scalar_lea.sflag [#allocation3], %s330
        %s332 = sand.u32 %s47, 1
        %s333 = smul.addr %s332, 8
        %s334 = scalar_lea.vmem [#allocation2], %s333
        // Predicated region
        $region53: #{tpu_custom_call.1} parent=51 // pred_check
          %p335 = pneg %p60
        $region54: #{tpu_custom_call.1} parent=51 // pred_check_branch
          %337 = sbr.rel (%p335) target = $region56
        $region55: #{tpu_custom_call.1} parent=51 // pred_region
          %338 = dma.done %s331, 128
        $region56: #{tpu_custom_call.1} parent=51 // pred_fallthru
          _
        // Predicated region
        $region57: #{tpu_custom_call.1} parent=51 // pred_check
          %p339 = pneg %p165
        $region58: #{tpu_custom_call.1} parent=51 // pred_check_branch
          %341 = sbr.rel (%p339) target = $region60
        $region59: #{tpu_custom_call.1} parent=51 // pred_region
          %342 = dma.done [#allocation6], 256
        $region60: #{tpu_custom_call.1} parent=51 // pred_fallthru
          _
        // Predicated region
        $region61: #{tpu_custom_call.1} parent=51 // pred_check
          %p343 = pneg %p186
        $region62: #{tpu_custom_call.1} parent=51 // pred_check_branch
          %345 = sbr.rel (%p343) target = $region64
        $region63: #{tpu_custom_call.1} parent=51 // pred_region
          %346 = dma.done [#allocation6], 256
        $region64: #{tpu_custom_call.1} parent=51 // pred_fallthru
          _
        // Predicated region
        $region65: #{tpu_custom_call.1} parent=51 // pred_check
          %p347 = pneg %p207
        $region66: #{tpu_custom_call.1} parent=51 // pred_check_branch
          %349 = sbr.rel (%p347) target = $region68
        $region67: #{tpu_custom_call.1} parent=51 // pred_region
          %350 = dma.done [#allocation9], 256
        $region68: #{tpu_custom_call.1} parent=51 // pred_fallthru
          _
        %s351 = sand.u32 %s47, 1
        %s352 = scalar_lea.sflag [#allocation3], %s351
        %s353 = sand.u32 %s47, 1
        %s354 = smul.addr %s353, 8
        %s355 = scalar_lea.vmem [#allocation2], %s354
        %p356 = pneg %p60
        %p357 = pneg %p57
        %p358 = pneg %p81
        %p359 = pneg %p78
        %p360 = pneg %p102
        %p361 = pneg %p99
        %p362 = pneg %p123
        %p363 = pneg %p120
        %p364 = pneg %p144
        %p365 = pneg %p141
        %p366 = pneg %p165
        %p367 = pneg %p162
        %p368 = pneg %p186
        %p369 = pneg %p183
        %p370 = pneg %p207
        %p371 = pneg %p204
        %p372 = pneg %p235
        %p373 = pneg %p232
        %s374 = sand.u32 %s222, 1
        %s375 = scalar_lea.sflag [#allocation4], %s374
        %s376 = sand.u32 %s222, 1
        %s377 = smul.addr %s376, 8
        %s378 = scalar_lea.vmem [#allocation10], %s377
        %v380 = vld [vmem:[%s334] sm:$0xff]
        %vm381 = vcmask 261120
        %v382 = vsel %vm381, %v380, 0.0
        %383 = vadd.xlane.f32.xlu0 %v382
        %v384 = vpop.xlane.xlu0 %383
        %v385 = vrcp.pop 32.0
        %v386 = vmul.f32 %v384, %v385
        %v387 = vsub.f32 %v380, %v386
        %v388 = vmul.f32 %v387, %v387
        %v389 = vsel %vm381, %v388, 0.0
        %390 = vadd.xlane.f32.xlu0 %v389
        %v391 = vpop.xlane.xlu0 %390
        %v392 = vmul.f32 %v391, %v385
        %v393 = vadd.f32 %v392, 1e-05
        %v394 = vrsqrt.pop %v393
        %v395 = vmul.f32 %v387, %v394
        %v396 = vld [vmem:[%s3] sm:$0x1]
        %v398 = vlaneseq
        %v399 = vshrl.u32 %v398, 7
        %v400 = vsub.s32 0, %v399
        %v401 = vrot.slane %v396, %v400
        %v403 = vmul.f32 %v395, %v401
        %v404 = vld [vmem:[%s4] sm:$0x1]
        %v406 = vlaneseq
        %v407 = vshrl.u32 %v406, 7
        %v408 = vsub.s32 0, %v407
        %v409 = vrot.slane %v404, %v408
        %v411 = vadd.f32 %v403, %v409
        %v412 = vld [vmem:[%s1] sm:$0x1]
        %v414 = vlaneseq
        %v415 = vshrl.u32 %v414, 7
        %v416 = vsub.s32 0, %v415
        %v417 = vrot.slane %v412, %v416
        %v419 = vmul.f32 %v395, %v417
        %v420 = vld [vmem:[%s2] sm:$0x1]
        %v422 = vlaneseq
        %v423 = vshrl.u32 %v422, 7
        %v424 = vsub.s32 0, %v423
        %v425 = vrot.slane %v420, %v424
        %v427 = vadd.f32 %v419, %v425
        %v428 = vpack.c.bf16 %v427, %v427
        %v429 = vld [vmem:[#allocation5] sm:$0xf]
        %v430 = vld [vmem:[#allocation5 + $0x4] sm:$0xf]
        %v431 = vld [vmem:[#allocation5 + $0x8] sm:$0xf]
        %v432 = vld [vmem:[#allocation5 + $0xc] sm:$0xf]
        %v437 = vunpack.c.l.b16 %v429
        %v438 = vunpack.c.l.b16 %v430
        %v439 = vunpack.c.l.b16 %v431
        %v440 = vunpack.c.l.b16 %v432
        %v441 = vpack.c.b16 %v438, %v437
        %v442 = vpack.c.b16 %v440, %v439
        %v446 = vsel %vm381, %v428, 0
        %448 = vmatprep.subr.bf16.mxu0 0
        %449 = vmatpush1.bf16.msra.mxu0 0
        %450 = vmatprep.subr.bf16.mxu0 0
        %451 = vmatpush1.bf16.msra.mxu0 0
        %452 = vmatprep.subr.bf16.mxu0 0
        %453 = vmatpush1.bf16.msra.mxu0 0
        %454 = vmatprep.subr.bf16.mxu0 0
        %455 = vmatpush1.bf16.msra.mxu0 0
        %456 = vmatprep.subr.bf16.mxu0 0
        %457 = vmatpush1.bf16.msra.mxu0 0
        %458 = vmatprep.subr.bf16.mxu0 0
        %459 = vmatpush1.bf16.msra.mxu0 0
        %460 = vmatprep.subr.bf16.mxu0 0
        %461 = vmatpush1.bf16.msra.mxu0 %v442
        %462 = vmatprep.subr.bf16.mxu0 0
        %463 = vmatpush1.bf16.msra.mxu0 %v441
        %464 = vmatprep.subr.bf16.mxu0 0
        %465 = vmatpush2.bf16.msra.mxu0 0
        %466 = vmatprep.subr.bf16.mxu0 0
        %467 = vmatpush2.bf16.msra.mxu0 0
        %468 = vmatprep.subr.bf16.mxu0 0
        %469 = vmatpush2.bf16.msra.mxu0 0
        %470 = vmatprep.subr.bf16.mxu0 0
        %471 = vmatpush2.bf16.msra.mxu0 0
        %472 = vmatprep.subr.bf16.mxu0 0
        %473 = vmatpush2.bf16.msra.mxu0 0
        %474 = vmatprep.subr.bf16.mxu0 0
        %475 = vmatpush2.bf16.msra.mxu0 0
        %476 = vmatprep.subr.bf16.mxu0 0
        %477 = vmatpush2.bf16.msra.mxu0 0
        %478 = vmatprep.subr.bf16.mxu0 0
        %479 = vmatpush2.bf16.msra.mxu0 0
        %480 = vmatprep.mubr.bf16.mxu0 0
        %481 = vmatmul.mubr.bf16.gmra.mxu0 %v446
        %v482 = vpop.f32.mrf.mxu0
        %v483 = vadd.f32 0.0, %v482
        %v484 = vpop.f32.mrf.mxu0
        %v485 = vpop.f32.mrf.mxu0
        %v486 = vpop.f32.mrf.mxu0
        %487 = vdwg.mxu0
        %v488 = vmul.f32 %v483, 0.35355338
        %v489 = vpack.c.bf16 %v411, %v411
        %v490 = vld [vmem:[#allocation7] sm:$0xf]
        %v491 = vld [vmem:[#allocation7 + $0x4] sm:$0xf]
        %v492 = vld [vmem:[#allocation7 + $0x8] sm:$0xf]
        %v493 = vld [vmem:[#allocation7 + $0xc] sm:$0xf]
        %v498 = vunpack.c.l.b16 %v490
        %v499 = vunpack.c.l.b16 %v491
        %v500 = vunpack.c.l.b16 %v492
        %v501 = vunpack.c.l.b16 %v493
        %v502 = vpack.c.b16 %v499, %v498
        %v503 = vpack.c.b16 %v501, %v500
        %v507 = vsel %vm381, %v489, 0
        %509 = vmatprep.subr.bf16.mxu0 0
        %510 = vmatpush1.bf16.msra.mxu0 0
        %511 = vmatprep.subr.bf16.mxu0 0
        %512 = vmatpush1.bf16.msra.mxu0 0
        %513 = vmatprep.subr.bf16.mxu0 0
        %514 = vmatpush1.bf16.msra.mxu0 0
        %515 = vmatprep.subr.bf16.mxu0 0
        %516 = vmatpush1.bf16.msra.mxu0 0
        %517 = vmatprep.subr.bf16.mxu0 0
        %518 = vmatpush1.bf16.msra.mxu0 0
        %519 = vmatprep.subr.bf16.mxu0 0
        %520 = vmatpush1.bf16.msra.mxu0 0
        %521 = vmatprep.subr.bf16.mxu0 0
        %522 = vmatpush1.bf16.msra.mxu0 %v503
        %523 = vmatprep.subr.bf16.mxu0 0
        %524 = vmatpush1.bf16.msra.mxu0 %v502
        %525 = vmatprep.subr.bf16.mxu0 0
        %526 = vmatpush2.bf16.msra.mxu0 0
        %527 = vmatprep.subr.bf16.mxu0 0
        %528 = vmatpush2.bf16.msra.mxu0 0
        %529 = vmatprep.subr.bf16.mxu0 0
        %530 = vmatpush2.bf16.msra.mxu0 0
        %531 = vmatprep.subr.bf16.mxu0 0
        %532 = vmatpush2.bf16.msra.mxu0 0
        %533 = vmatprep.subr.bf16.mxu0 0
        %534 = vmatpush2.bf16.msra.mxu0 0
        %535 = vmatprep.subr.bf16.mxu0 0
        %536 = vmatpush2.bf16.msra.mxu0 0
        %537 = vmatprep.subr.bf16.mxu0 0
        %538 = vmatpush2.bf16.msra.mxu0 0
        %539 = vmatprep.subr.bf16.mxu0 0
        %540 = vmatpush2.bf16.msra.mxu0 0
        %541 = vmatprep.mubr.bf16.mxu0 0
        %542 = vmatmul.mubr.bf16.gmra.mxu0 %v507
        %v543 = vpop.f32.mrf.mxu0
        %v544 = vadd.f32 0.0, %v543
        %v545 = vpop.f32.mrf.mxu0
        %v546 = vpop.f32.mrf.mxu0
        %v547 = vpop.f32.mrf.mxu0
        %548 = vdwg.mxu0
        %v549 = vpack.c.bf16 %v544, %v544
        %v550 = vpack.c.bf16 %v488, %v488
        %vm551 = vcmask 64512
        %v553 = vsel %vm551, %v550, 0
        %v556 = vsel %vm551, %v549, 0
        %558 = vmatprep.subr.bf16.mxu0 0
        %559 = vmatpush1.bf16.xpose.msra.mxu0 0
        %560 = vmatprep.subr.bf16.mxu0 0
        %561 = vmatpush1.bf16.xpose.msra.mxu0 0
        %562 = vmatprep.subr.bf16.mxu0 0
        %563 = vmatpush1.bf16.xpose.msra.mxu0 0
        %564 = vmatprep.subr.bf16.mxu0 0
        %565 = vmatpush1.bf16.xpose.msra.mxu0 0
        %566 = vmatprep.subr.bf16.mxu0 0
        %567 = vmatpush1.bf16.xpose.msra.mxu0 0
        %568 = vmatprep.subr.bf16.mxu0 0
        %569 = vmatpush1.bf16.xpose.msra.mxu0 0
        %570 = vmatprep.subr.bf16.mxu0 0
        %571 = vmatpush1.bf16.xpose.msra.mxu0 0
        %572 = vmatprep.subr.bf16.mxu0 0
        %573 = vmatpush1.bf16.xpose.msra.mxu0 %v556
        %574 = vmatprep.subr.bf16.mxu0 0
        %575 = vmatpush2.bf16.xpose.msra.mxu0 0
        %576 = vmatprep.subr.bf16.mxu0 0
        %577 = vmatpush2.bf16.xpose.msra.mxu0 0
        %578 = vmatprep.subr.bf16.mxu0 0
        %579 = vmatpush2.bf16.xpose.msra.mxu0 0
        %580 = vmatprep.subr.bf16.mxu0 0
        %581 = vmatpush2.bf16.xpose.msra.mxu0 0
        %582 = vmatprep.subr.bf16.mxu0 0
        %583 = vmatpush2.bf16.xpose.msra.mxu0 0
        %584 = vmatprep.subr.bf16.mxu0 0
        %585 = vmatpush2.bf16.xpose.msra.mxu0 0
        %586 = vmatprep.subr.bf16.mxu0 0
        %587 = vmatpush2.bf16.xpose.msra.mxu0 0
        %588 = vmatprep.subr.bf16.mxu0 0
        %589 = vmatpush2.bf16.xpose.msra.mxu0 0
        %590 = vmatprep.mubr.bf16.mxu0 0
        %591 = vmatmul.mubr.bf16.gmra.mxu0 %v553
        %v592 = vpop.f32.mrf.mxu0
        %v593 = vadd.f32 0.0, %v592
        %v594 = vpop.f32.mrf.mxu0
        %v595 = vpop.f32.mrf.mxu0
        %v596 = vpop.f32.mrf.mxu0
        %597 = vdwg.mxu0
        %v598 = vsel %vm551, %v593, -inf
        %599 = vmax.xlane.f32.xlu0 %v598
        %v600 = vpop.xlane.xlu0 %599
        %v601 = vsub.f32 %v593, %v600
        %v602 = vmul.f32 %v601, 1.442695
        %v603 = vpow.pop %v602
        %v604 = vsel %vm551, %v603, 0.0
        %605 = vadd.xlane.f32.xlu0 %v604
        %v606 = vpop.xlane.xlu0 %605
        %v607 = vrcp.pop %v606
        %v608 = vmul.f32 %v603, %v607
        %v609 = vpack.c.bf16 %v608, %v608
        %611 = vrot.lane.b32.xlu0 %v549, 96
        %v612 = vpop.permute.xlu0 %611
        %v614 = vsel %vm551, %v609, 0
        %vm616 = vcmask 1043456
        %v618 = vsel %vm616, %v612, 0
        %620 = vmatprep.subr.bf16.mxu0 0
        %621 = vmatpush1.bf16.msra.mxu0 0
        %622 = vmatprep.subr.bf16.mxu0 0
        %623 = vmatpush1.bf16.msra.mxu0 0
        %624 = vmatprep.subr.bf16.mxu0 0
        %625 = vmatpush1.bf16.msra.mxu0 0
        %626 = vmatprep.subr.bf16.mxu0 0
        %627 = vmatpush1.bf16.msra.mxu0 0
        %628 = vmatprep.subr.bf16.mxu0 0
        %629 = vmatpush1.bf16.msra.mxu0 0
        %630 = vmatprep.subr.bf16.mxu0 0
        %631 = vmatpush1.bf16.msra.mxu0 0
        %632 = vmatprep.subr.bf16.mxu0 0
        %633 = vmatpush1.bf16.msra.mxu0 0
        %634 = vmatprep.subr.bf16.mxu0 0
        %635 = vmatpush1.bf16.msra.mxu0 %v618
        %636 = vmatprep.subr.bf16.mxu0 0
        %637 = vmatpush2.bf16.msra.mxu0 0
        %638 = vmatprep.subr.bf16.mxu0 0
        %639 = vmatpush2.bf16.msra.mxu0 0
        %640 = vmatprep.subr.bf16.mxu0 0
        %641 = vmatpush2.bf16.msra.mxu0 0
        %642 = vmatprep.subr.bf16.mxu0 0
        %643 = vmatpush2.bf16.msra.mxu0 0
        %644 = vmatprep.subr.bf16.mxu0 0
        %645 = vmatpush2.bf16.msra.mxu0 0
        %646 = vmatprep.subr.bf16.mxu0 0
        %647 = vmatpush2.bf16.msra.mxu0 0
        %648 = vmatprep.subr.bf16.mxu0 0
        %649 = vmatpush2.bf16.msra.mxu0 0
        %650 = vmatprep.subr.bf16.mxu0 0
        %651 = vmatpush2.bf16.msra.mxu0 0
        %652 = vmatprep.mubr.bf16.mxu0 0
        %653 = vmatmul.mubr.bf16.gmra.mxu0 %v614
        %v654 = vpop.f32.mrf.mxu0
        %v655 = vadd.f32 0.0, %v654
        %v656 = vpop.f32.mrf.mxu0
        %v657 = vpop.f32.mrf.mxu0
        %v658 = vpop.f32.mrf.mxu0
        %659 = vdwg.mxu0
        %661 = vrot.lane.b32.xlu0 %v550, 120
        %v662 = vpop.permute.xlu0 %661
        %663 = vrot.lane.b32.xlu0 %v549, 120
        %v664 = vpop.permute.xlu0 %663
        %v666 = vsel %vm551, %v662, 0
        %v669 = vsel %vm551, %v664, 0
        %671 = vmatprep.subr.bf16.mxu0 0
        %672 = vmatpush1.bf16.xpose.msra.mxu0 0
        %673 = vmatprep.subr.bf16.mxu0 0
        %674 = vmatpush1.bf16.xpose.msra.mxu0 0
        %675 = vmatprep.subr.bf16.mxu0 0
        %676 = vmatpush1.bf16.xpose.msra.mxu0 0
        %677 = vmatprep.subr.bf16.mxu0 0
        %678 = vmatpush1.bf16.xpose.msra.mxu0 0
        %679 = vmatprep.subr.bf16.mxu0 0
        %680 = vmatpush1.bf16.xpose.msra.mxu0 0
        %681 = vmatprep.subr.bf16.mxu0 0
        %682 = vmatpush1.bf16.xpose.msra.mxu0 0
        %683 = vmatprep.subr.bf16.mxu0 0
        %684 = vmatpush1.bf16.xpose.msra.mxu0 0
        %685 = vmatprep.subr.bf16.mxu0 0
        %686 = vmatpush1.bf16.xpose.msra.mxu0 %v669
        %687 = vmatprep.subr.bf16.mxu0 0
        %688 = vmatpush2.bf16.xpose.msra.mxu0 0
        %689 = vmatprep.subr.bf16.mxu0 0
        %690 = vmatpush2.bf16.xpose.msra.mxu0 0
        %691 = vmatprep.subr.bf16.mxu0 0
        %692 = vmatpush2.bf16.xpose.msra.mxu0 0
        %693 = vmatprep.subr.bf16.mxu0 0
        %694 = vmatpush2.bf16.xpose.msra.mxu0 0
        %695 = vmatprep.subr.bf16.mxu0 0
        %696 = vmatpush2.bf16.xpose.msra.mxu0 0
        %697 = vmatprep.subr.bf16.mxu0 0
        %698 = vmatpush2.bf16.xpose.msra.mxu0 0
        %699 = vmatprep.subr.bf16.mxu0 0
        %700 = vmatpush2.bf16.xpose.msra.mxu0 0
        %701 = vmatprep.subr.bf16.mxu0 0
        %702 = vmatpush2.bf16.xpose.msra.mxu0 0
        %703 = vmatprep.mubr.bf16.mxu0 0
        %704 = vmatmul.mubr.bf16.gmra.mxu0 %v666
        %v705 = vpop.f32.mrf.mxu0
        %v706 = vadd.f32 0.0, %v705
        %v707 = vpop.f32.mrf.mxu0
        %v708 = vpop.f32.mrf.mxu0
        %v709 = vpop.f32.mrf.mxu0
        %710 = vdwg.mxu0
        %v711 = vsel %vm551, %v706, -inf
        %712 = vmax.xlane.f32.xlu0 %v711
        %v713 = vpop.xlane.xlu0 %712
        %v714 = vsub.f32 %v706, %v713
        %v715 = vmul.f32 %v714, 1.442695
        %v716 = vpow.pop %v715
        %v717 = vsel %vm551, %v716, 0.0
        %718 = vadd.xlane.f32.xlu0 %v717
        %v719 = vpop.xlane.xlu0 %718
        %v720 = vrcp.pop %v719
        %v721 = vmul.f32 %v716, %v720
        %v722 = vpack.c.bf16 %v721, %v721
        %723 = vrot.lane.b32.xlu0 %v549, 88
        %v724 = vpop.permute.xlu0 %723
        %v726 = vsel %vm551, %v722, 0
        %v729 = vsel %vm616, %v724, 0
        %731 = vmatprep.subr.bf16.mxu0 0
        %732 = vmatpush1.bf16.msra.mxu0 0
        %733 = vmatprep.subr.bf16.mxu0 0
        %734 = vmatpush1.bf16.msra.mxu0 0
        %735 = vmatprep.subr.bf16.mxu0 0
        %736 = vmatpush1.bf16.msra.mxu0 0
        %737 = vmatprep.subr.bf16.mxu0 0
        %738 = vmatpush1.bf16.msra.mxu0 0
        %739 = vmatprep.subr.bf16.mxu0 0
        %740 = vmatpush1.bf16.msra.mxu0 0
        %741 = vmatprep.subr.bf16.mxu0 0
        %742 = vmatpush1.bf16.msra.mxu0 0
        %743 = vmatprep.subr.bf16.mxu0 0
        %744 = vmatpush1.bf16.msra.mxu0 0
        %745 = vmatprep.subr.bf16.mxu0 0
        %746 = vmatpush1.bf16.msra.mxu0 %v729
        %747 = vmatprep.subr.bf16.mxu0 0
        %748 = vmatpush2.bf16.msra.mxu0 0
        %749 = vmatprep.subr.bf16.mxu0 0
        %750 = vmatpush2.bf16.msra.mxu0 0
        %751 = vmatprep.subr.bf16.mxu0 0
        %752 = vmatpush2.bf16.msra.mxu0 0
        %753 = vmatprep.subr.bf16.mxu0 0
        %754 = vmatpush2.bf16.msra.mxu0 0
        %755 = vmatprep.subr.bf16.mxu0 0
        %756 = vmatpush2.bf16.msra.mxu0 0
        %757 = vmatprep.subr.bf16.mxu0 0
        %758 = vmatpush2.bf16.msra.mxu0 0
        %759 = vmatprep.subr.bf16.mxu0 0
        %760 = vmatpush2.bf16.msra.mxu0 0
        %761 = vmatprep.subr.bf16.mxu0 0
        %762 = vmatpush2.bf16.msra.mxu0 0
        %763 = vmatprep.mubr.bf16.mxu0 0
        %764 = vmatmul.mubr.bf16.gmra.mxu0 %v726
        %v765 = vpop.f32.mrf.mxu0
        %v766 = vadd.f32 0.0, %v765
        %v767 = vpop.f32.mrf.mxu0
        %v768 = vpop.f32.mrf.mxu0
        %v769 = vpop.f32.mrf.mxu0
        %770 = vdwg.mxu0
        %771 = vrot.lane.b32.xlu0 %v550, 112
        %v772 = vpop.permute.xlu0 %771
        %773 = vrot.lane.b32.xlu0 %v549, 112
        %v774 = vpop.permute.xlu0 %773
        %v776 = vsel %vm551, %v772, 0
        %v779 = vsel %vm551, %v774, 0
        %781 = vmatprep.subr.bf16.mxu0 0
        %782 = vmatpush1.bf16.xpose.msra.mxu0 0
        %783 = vmatprep.subr.bf16.mxu0 0
        %784 = vmatpush1.bf16.xpose.msra.mxu0 0
        %785 = vmatprep.subr.bf16.mxu0 0
        %786 = vmatpush1.bf16.xpose.msra.mxu0 0
        %787 = vmatprep.subr.bf16.mxu0 0
        %788 = vmatpush1.bf16.xpose.msra.mxu0 0
        %789 = vmatprep.subr.bf16.mxu0 0
        %790 = vmatpush1.bf16.xpose.msra.mxu0 0
        %791 = vmatprep.subr.bf16.mxu0 0
        %792 = vmatpush1.bf16.xpose.msra.mxu0 0
        %793 = vmatprep.subr.bf16.mxu0 0
        %794 = vmatpush1.bf16.xpose.msra.mxu0 0
        %795 = vmatprep.subr.bf16.mxu0 0
        %796 = vmatpush1.bf16.xpose.msra.mxu0 %v779
        %797 = vmatprep.subr.bf16.mxu0 0
        %798 = vmatpush2.bf16.xpose.msra.mxu0 0
        %799 = vmatprep.subr.bf16.mxu0 0
        %800 = vmatpush2.bf16.xpose.msra.mxu0 0
        %801 = vmatprep.subr.bf16.mxu0 0
        %802 = vmatpush2.bf16.xpose.msra.mxu0 0
        %803 = vmatprep.subr.bf16.mxu0 0
        %804 = vmatpush2.bf16.xpose.msra.mxu0 0
        %805 = vmatprep.subr.bf16.mxu0 0
        %806 = vmatpush2.bf16.xpose.msra.mxu0 0
        %807 = vmatprep.subr.bf16.mxu0 0
        %808 = vmatpush2.bf16.xpose.msra.mxu0 0
        %809 = vmatprep.subr.bf16.mxu0 0
        %810 = vmatpush2.bf16.xpose.msra.mxu0 0
        %811 = vmatprep.subr.bf16.mxu0 0
        %812 = vmatpush2.bf16.xpose.msra.mxu0 0
        %813 = vmatprep.mubr.bf16.mxu0 0
        %814 = vmatmul.mubr.bf16.gmra.mxu0 %v776
        %v815 = vpop.f32.mrf.mxu0
        %v816 = vadd.f32 0.0, %v815
        %v817 = vpop.f32.mrf.mxu0
        %v818 = vpop.f32.mrf.mxu0
        %v819 = vpop.f32.mrf.mxu0
        %820 = vdwg.mxu0
        %v821 = vsel %vm551, %v816, -inf
        %822 = vmax.xlane.f32.xlu0 %v821
        %v823 = vpop.xlane.xlu0 %822
        %v824 = vsub.f32 %v816, %v823
        %v825 = vmul.f32 %v824, 1.442695
        %v826 = vpow.pop %v825
        %v827 = vsel %vm551, %v826, 0.0
        %828 = vadd.xlane.f32.xlu0 %v827
        %v829 = vpop.xlane.xlu0 %828
        %v830 = vrcp.pop %v829
        %v831 = vmul.f32 %v826, %v830
        %v832 = vpack.c.bf16 %v831, %v831
        %833 = vrot.lane.b32.xlu0 %v549, 80
        %v834 = vpop.permute.xlu0 %833
        %v836 = vsel %vm551, %v832, 0
        %v839 = vsel %vm616, %v834, 0
        %841 = vmatprep.subr.bf16.mxu0 0
        %842 = vmatpush1.bf16.msra.mxu0 0
        %843 = vmatprep.subr.bf16.mxu0 0
        %844 = vmatpush1.bf16.msra.mxu0 0
        %845 = vmatprep.subr.bf16.mxu0 0
        %846 = vmatpush1.bf16.msra.mxu0 0
        %847 = vmatprep.subr.bf16.mxu0 0
        %848 = vmatpush1.bf16.msra.mxu0 0
        %849 = vmatprep.subr.bf16.mxu0 0
        %850 = vmatpush1.bf16.msra.mxu0 0
        %851 = vmatprep.subr.bf16.mxu0 0
        %852 = vmatpush1.bf16.msra.mxu0 0
        %853 = vmatprep.subr.bf16.mxu0 0
        %854 = vmatpush1.bf16.msra.mxu0 0
        %855 = vmatprep.subr.bf16.mxu0 0
        %856 = vmatpush1.bf16.msra.mxu0 %v839
        %857 = vmatprep.subr.bf16.mxu0 0
        %858 = vmatpush2.bf16.msra.mxu0 0
        %859 = vmatprep.subr.bf16.mxu0 0
        %860 = vmatpush2.bf16.msra.mxu0 0
        %861 = vmatprep.subr.bf16.mxu0 0
        %862 = vmatpush2.bf16.msra.mxu0 0
        %863 = vmatprep.subr.bf16.mxu0 0
        %864 = vmatpush2.bf16.msra.mxu0 0
        %865 = vmatprep.subr.bf16.mxu0 0
        %866 = vmatpush2.bf16.msra.mxu0 0
        %867 = vmatprep.subr.bf16.mxu0 0
        %868 = vmatpush2.bf16.msra.mxu0 0
        %869 = vmatprep.subr.bf16.mxu0 0
        %870 = vmatpush2.bf16.msra.mxu0 0
        %871 = vmatprep.subr.bf16.mxu0 0
        %872 = vmatpush2.bf16.msra.mxu0 0
        %873 = vmatprep.mubr.bf16.mxu0 0
        %874 = vmatmul.mubr.bf16.gmra.mxu0 %v836
        %v875 = vpop.f32.mrf.mxu0
        %v876 = vadd.f32 0.0, %v875
        %v877 = vpop.f32.mrf.mxu0
        %v878 = vpop.f32.mrf.mxu0
        %v879 = vpop.f32.mrf.mxu0
        %880 = vdwg.mxu0
        %881 = vrot.lane.b32.xlu0 %v550, 104
        %v882 = vpop.permute.xlu0 %881
        %883 = vrot.lane.b32.xlu0 %v549, 104
        %v884 = vpop.permute.xlu0 %883
        %v886 = vsel %vm551, %v882, 0
        %v889 = vsel %vm551, %v884, 0
        %891 = vmatprep.subr.bf16.mxu0 0
        %892 = vmatpush1.bf16.xpose.msra.mxu0 0
        %893 = vmatprep.subr.bf16.mxu0 0
        %894 = vmatpush1.bf16.xpose.msra.mxu0 0
        %895 = vmatprep.subr.bf16.mxu0 0
        %896 = vmatpush1.bf16.xpose.msra.mxu0 0
        %897 = vmatprep.subr.bf16.mxu0 0
        %898 = vmatpush1.bf16.xpose.msra.mxu0 0
        %899 = vmatprep.subr.bf16.mxu0 0
        %900 = vmatpush1.bf16.xpose.msra.mxu0 0
        %901 = vmatprep.subr.bf16.mxu0 0
        %902 = vmatpush1.bf16.xpose.msra.mxu0 0
        %903 = vmatprep.subr.bf16.mxu0 0
        %904 = vmatpush1.bf16.xpose.msra.mxu0 0
        %905 = vmatprep.subr.bf16.mxu0 0
        %906 = vmatpush1.bf16.xpose.msra.mxu0 %v889
        %907 = vmatprep.subr.bf16.mxu0 0
        %908 = vmatpush2.bf16.xpose.msra.mxu0 0
        %909 = vmatprep.subr.bf16.mxu0 0
        %910 = vmatpush2.bf16.xpose.msra.mxu0 0
        %911 = vmatprep.subr.bf16.mxu0 0
        %912 = vmatpush2.bf16.xpose.msra.mxu0 0
        %913 = vmatprep.subr.bf16.mxu0 0
        %914 = vmatpush2.bf16.xpose.msra.mxu0 0
        %915 = vmatprep.subr.bf16.mxu0 0
        %916 = vmatpush2.bf16.xpose.msra.mxu0 0
        %917 = vmatprep.subr.bf16.mxu0 0
        %918 = vmatpush2.bf16.xpose.msra.mxu0 0
        %919 = vmatprep.subr.bf16.mxu0 0
        %920 = vmatpush2.bf16.xpose.msra.mxu0 0
        %921 = vmatprep.subr.bf16.mxu0 0
        %922 = vmatpush2.bf16.xpose.msra.mxu0 0
        %923 = vmatprep.mubr.bf16.mxu0 0
        %924 = vmatmul.mubr.bf16.gmra.mxu0 %v886
        %v925 = vpop.f32.mrf.mxu0
        %v926 = vadd.f32 0.0, %v925
        %v927 = vpop.f32.mrf.mxu0
        %v928 = vpop.f32.mrf.mxu0
        %v929 = vpop.f32.mrf.mxu0
        %930 = vdwg.mxu0
        %v931 = vsel %vm551, %v926, -inf
        %932 = vmax.xlane.f32.xlu0 %v931
        %v933 = vpop.xlane.xlu0 %932
        %v934 = vsub.f32 %v926, %v933
        %v935 = vmul.f32 %v934, 1.442695
        %v936 = vpow.pop %v935
        %v937 = vsel %vm551, %v936, 0.0
        %938 = vadd.xlane.f32.xlu0 %v937
        %v939 = vpop.xlane.xlu0 %938
        %v940 = vrcp.pop %v939
        %v941 = vmul.f32 %v936, %v940
        %v942 = vpack.c.bf16 %v941, %v941
        %943 = vrot.lane.b32.xlu0 %v549, 72
        %v944 = vpop.permute.xlu0 %943
        %v946 = vsel %vm551, %v942, 0
        %v949 = vsel %vm616, %v944, 0
        %951 = vmatprep.subr.bf16.mxu0 0
        %952 = vmatpush1.bf16.msra.mxu0 0
        %953 = vmatprep.subr.bf16.mxu0 0
        %954 = vmatpush1.bf16.msra.mxu0 0
        %955 = vmatprep.subr.bf16.mxu0 0
        %956 = vmatpush1.bf16.msra.mxu0 0
        %957 = vmatprep.subr.bf16.mxu0 0
        %958 = vmatpush1.bf16.msra.mxu0 0
        %959 = vmatprep.subr.bf16.mxu0 0
        %960 = vmatpush1.bf16.msra.mxu0 0
        %961 = vmatprep.subr.bf16.mxu0 0
        %962 = vmatpush1.bf16.msra.mxu0 0
        %963 = vmatprep.subr.bf16.mxu0 0
        %964 = vmatpush1.bf16.msra.mxu0 0
        %965 = vmatprep.subr.bf16.mxu0 0
        %966 = vmatpush1.bf16.msra.mxu0 %v949
        %967 = vmatprep.subr.bf16.mxu0 0
        %968 = vmatpush2.bf16.msra.mxu0 0
        %969 = vmatprep.subr.bf16.mxu0 0
        %970 = vmatpush2.bf16.msra.mxu0 0
        %971 = vmatprep.subr.bf16.mxu0 0
        %972 = vmatpush2.bf16.msra.mxu0 0
        %973 = vmatprep.subr.bf16.mxu0 0
        %974 = vmatpush2.bf16.msra.mxu0 0
        %975 = vmatprep.subr.bf16.mxu0 0
        %976 = vmatpush2.bf16.msra.mxu0 0
        %977 = vmatprep.subr.bf16.mxu0 0
        %978 = vmatpush2.bf16.msra.mxu0 0
        %979 = vmatprep.subr.bf16.mxu0 0
        %980 = vmatpush2.bf16.msra.mxu0 0
        %981 = vmatprep.subr.bf16.mxu0 0
        %982 = vmatpush2.bf16.msra.mxu0 0
        %983 = vmatprep.mubr.bf16.mxu0 0
        %984 = vmatmul.mubr.bf16.gmra.mxu0 %v946
        %v985 = vpop.f32.mrf.mxu0
        %v986 = vadd.f32 0.0, %v985
        %v987 = vpop.f32.mrf.mxu0
        %v988 = vpop.f32.mrf.mxu0
        %v989 = vpop.f32.mrf.mxu0
        %990 = vdwg.mxu0
        %992 = vrot.lane.b32.xlu0 %v766, 8
        %v993 = vpop.permute.xlu0 %992
        %996 = vrot.lane.b32.xlu0 %v876, 16
        %v997 = vpop.permute.xlu0 %996
        %1000 = vrot.lane.b32.xlu0 %v986, 24
        %v1001 = vpop.permute.xlu0 %1000
        %v1003 = vsel %vm551, %v655, %v993
        %vm1004 = vcmask 130048
        %v1005 = vsel %vm1004, %v1003, %v997
        %vm1006 = vcmask 195584
        %v1007 = vsel %vm1006, %v1005, %v1001
        %v1008 = vpack.c.bf16 %v1007, %v1007
        %v1009 = vld [vmem:[#allocation8] sm:$0xf]
        %v1010 = vld [vmem:[#allocation8 + $0x4] sm:$0xf]
        %v1011 = vld [vmem:[#allocation8 + $0x8] sm:$0xf]
        %v1012 = vld [vmem:[#allocation8 + $0xc] sm:$0xf]
        %v1017 = vunpack.c.l.b16 %v1009
        %v1018 = vunpack.c.l.b16 %v1010
        %v1019 = vunpack.c.l.b16 %v1011
        %v1020 = vunpack.c.l.b16 %v1012
        %v1021 = vpack.c.b16 %v1018, %v1017
        %v1022 = vpack.c.b16 %v1020, %v1019
        %v1026 = vsel %vm381, %v1008, 0
        %1028 = vmatprep.subr.bf16.mxu0 0
        %1029 = vmatpush1.bf16.msra.mxu0 0
        %1030 = vmatprep.subr.bf16.mxu0 0
        %1031 = vmatpush1.bf16.msra.mxu0 0
        %1032 = vmatprep.subr.bf16.mxu0 0
        %1033 = vmatpush1.bf16.msra.mxu0 0
        %1034 = vmatprep.subr.bf16.mxu0 0
        %1035 = vmatpush1.bf16.msra.mxu0 0
        %1036 = vmatprep.subr.bf16.mxu0 0
        %1037 = vmatpush1.bf16.msra.mxu0 0
        %1038 = vmatprep.subr.bf16.mxu0 0
        %1039 = vmatpush1.bf16.msra.mxu0 0
        %1040 = vmatprep.subr.bf16.mxu0 0
        %1041 = vmatpush1.bf16.msra.mxu0 %v1022
        %1042 = vmatprep.subr.bf16.mxu0 0
        %1043 = vmatpush1.bf16.msra.mxu0 %v1021
        %1044 = vmatprep.subr.bf16.mxu0 0
        %1045 = vmatpush2.bf16.msra.mxu0 0
        %1046 = vmatprep.subr.bf16.mxu0 0
        %1047 = vmatpush2.bf16.msra.mxu0 0
        %1048 = vmatprep.subr.bf16.mxu0 0
        %1049 = vmatpush2.bf16.msra.mxu0 0
        %1050 = vmatprep.subr.bf16.mxu0 0
        %1051 = vmatpush2.bf16.msra.mxu0 0
        %1052 = vmatprep.subr.bf16.mxu0 0
        %1053 = vmatpush2.bf16.msra.mxu0 0
        %1054 = vmatprep.subr.bf16.mxu0 0
        %1055 = vmatpush2.bf16.msra.mxu0 0
        %1056 = vmatprep.subr.bf16.mxu0 0
        %1057 = vmatpush2.bf16.msra.mxu0 0
        %1058 = vmatprep.subr.bf16.mxu0 0
        %1059 = vmatpush2.bf16.msra.mxu0 0
        %1060 = vmatprep.mubr.bf16.mxu0 0
        %1061 = vmatmul.mubr.bf16.gmra.mxu0 %v1026
        %v1062 = vpop.f32.mrf.mxu0
        %v1063 = vadd.f32 0.0, %v1062
        %v1064 = vpop.f32.mrf.mxu0
        %v1065 = vpop.f32.mrf.mxu0
        %v1066 = vpop.f32.mrf.mxu0
        %1067 = vdwg.mxu0
        %v1068 = vadd.f32 %v380, %v1063
        %1069 = vst.msk [vmem:[%s378] sm:$0xff] %vm381, %v1068
        %s1070 = sand.u32 %s222, 1
        %s1071 = scalar_lea.sflag [#allocation4], %s1070
        %s1072 = sand.u32 %s222, 1
        %s1073 = smul.addr %s1072, 8
        %s1074 = scalar_lea.vmem [#allocation10], %s1073
        // Predicated region
        $region69: #{tpu_custom_call.1} parent=51 // pred_check
          %p1075 = pneg %p232
        $region70: #{tpu_custom_call.1} parent=51 // pred_check_branch
          %1077 = sbr.rel (%p1075) target = $region72
        $region71: #{tpu_custom_call.1} parent=51 // pred_region
          %s1079 = ssub.s32 128, 128
          %1080 = vsyncadd %s1071, %s1079
          %s1081 = sadd.s32 %s32, %s31
          %s1082 = smul.addr %s1081, 128
          %s1083 = scalar_lea.hbm %s8, %s1082
          %s1085 = sshll.u32 %s1074, 4
          %s1086 = int_to_ptr.vmem [resolvable:$true] %s1085
          %1088 = dma.vmem_to_hbm [thread:$0]  %s1086, 128, %s1083, %s1071
        $region72: #{tpu_custom_call.1} parent=51 // pred_fallthru
          _
      $region52: #{tpu_custom_call.1} parent=5 // pred_fallthru
        _
      %p1089 = scmp.le.s32.totalorder 2, %s22
      // Predicated region
      $region73: #{tpu_custom_call.1} parent=5 // pred_check
        %p1090 = pneg %p1089
      $region74: #{tpu_custom_call.1} parent=5 // pred_check_branch
        %1092 = sbr.rel (%p1090) target = $region76
      $region75: #{tpu_custom_call.1} parent=5 // pred_region
        %s1093 = ssub.s32 %s22, 2
        // Predicated region
        $region77: #{tpu_custom_call.1} parent=75 // pred_check
          %p1094 = pneg %p238
        $region78: #{tpu_custom_call.1} parent=75 // pred_check_branch
          %1096 = sbr.rel (%p1094) target = $region80
        $region79: #{tpu_custom_call.1} parent=75 // pred_region
          %s1097 = sand.u32 %s223, 1
          %s1098 = scalar_lea.sflag [#allocation4], %s1097
          %s1099 = sand.u32 %s223, 1
          %s1100 = smul.addr %s1099, 8
          %s1101 = scalar_lea.vmem [#allocation10], %s1100
          %1102 = dma.done %s1098, 128
        $region80: #{tpu_custom_call.1} parent=75 // pred_fallthru
          _
      $region76: #{tpu_custom_call.1} parent=5 // pred_fallthru
        _
    $region6: #{tpu_custom_call.1} parent=1 // loop_footer
      %s26 = sadd.s32 1, %s22
    $region7: #{tpu_custom_call.1} parent=1 // loop_footer_branch
      %21 = sbr.rel target = $region3
    $region8: #{tpu_custom_call.1} parent=1 // loop_exit
      _
    %1103 = vsyncpa [#allocation3], 1
    %s1104 = scalar_lea.sflag [#allocation3], 1
    %1105 = vsyncpa %s1104, 1
    %1106 = vsyncpa [#allocation6], 1
    %1107 = vsyncpa [#allocation9], 1
    %1108 = vsyncpa [#allocation4], 1
    %s1109 = scalar_lea.sflag [#allocation4], 1
    %1110 = vsyncpa %s1109, 1

</llo_original>
